<compile_context>
chip_gen: v7x
topology: tpu7x:2x2x1
jax: 0.10.0
libtpu: 0.0.40
codegen_flags: <defaults>
</compile_context>

<pallas_src>
import functools

import jax
import jax.numpy as jnp
from jax.experimental import pallas as pl
from jax.experimental.pallas import tpu as pltpu

_VMEM_IO_BUDGET = 20 * 1024 * 1024   # target for blocks + temporaries estimate
_VMEM_LIMIT = 32 * 1024 * 1024       # safe on v5e (128 MiB phys) and v7x (64 MiB phys)


def _round_up(x, m):
    return ((x + m - 1) // m) * m


def _wce_kernel(logits_ref, labels_ref, out_ref, *, w0, w1, hw, tile_n):
    """Grid = (pixel split [parallel], batch [parallel], tile [arbitrary]).

    logits_ref: (C, TN) float      labels_ref: (1, TN) int8/int32
    out_ref:    (2, TN) f32 packed accumulator (row 0 = weighted CE,
                row 1 = pixel weight), resident across the arbitrary axis.
    """
    s = pl.program_id(0)          # pixel-split index
    t = pl.program_id(2)          # tile index within the split (innermost)
    n_t = pl.num_programs(2)

    @pl.when(t == 0)
    def _():
        out_ref[...] = jnp.zeros_like(out_ref)

    logits = logits_ref[...].astype(jnp.float32)          # (C, TN)
    labels = labels_ref[...].astype(jnp.int32)            # (1, TN)

    # stable logsumexp over the class (sublane) axis
    # TODO(synk): on v7x the EUP (C exps + log per pixel) can co-bind with HBM;
    # if a bundle dump shows that, do the exp in bf16 and keep sum/log in f32.
    m = jnp.max(logits, axis=0, keepdims=True)             # (1, TN)
    lse = m + jnp.log(jnp.sum(jnp.exp(logits - m), axis=0, keepdims=True))

    # only classes 0 and 1 carry weight -> gather-free weighted CE
    is0 = (labels == 0).astype(jnp.float32)                # (1, TN)
    is1 = (labels == 1).astype(jnp.float32)
    nll0 = lse - logits[0:1, :]                            # -log p(class 0)
    nll1 = lse - logits[1:2, :]                            # -log p(class 1)

    wce = jnp.float32(w0) * is0 * nll0 + jnp.float32(w1) * is1 * nll1
    pw = jnp.float32(w0) * is0 + jnp.float32(w1) * is1

    # In-kernel tail mask (replaces the old wrapper jnp.pad). Lanes whose
    # global pixel index >= HW come from a partial / clamped block read and
    # hold unspecified data (possibly NaN/Inf), so mask with jnp.where —
    # multiplying by 0 would not be enough (NaN * 0 == NaN).
    pix = (s * n_t + t) * tile_n + jax.lax.broadcasted_iota(
        jnp.int32, (1, tile_n), 1)
    valid = pix < hw
    wce = jnp.where(valid, wce, 0.0)
    pw = jnp.where(valid, pw, 0.0)

    out_ref[...] += jnp.concatenate([wce, pw], axis=0)     # (2, TN)


def weighted_ce_loss(predict, labels, cls_num, pix_weights, *, tile_n=None):
    """predict: [B, C, H, W] float logits (f32 or bf16); labels: [B, H, W] ints.

    pix_weights must be static Python numbers (they are baked into the kernel,
    matching the nn.Module __init__ semantics).
    """
    B, C, H, W = predict.shape
    assert C == cls_num and cls_num >= 2
    HW = H * W

    # --- C-aware, VMEM-budgeted tile size --------------------------------
    if tile_n is None:
        c_pad = _round_up(C, 8)
        # bytes/lane: double-buffered logits + labels + packed output blocks,
        # plus an allowance for block-sized f32 temporaries inside the kernel.
        per_lane = 2 * (4 * c_pad + 32 + 32) + 4 * 4 * c_pad
        tile_n = max(128, ((_VMEM_IO_BUDGET // per_lane) // 128) * 128)
    if HW <= tile_n:
        tile_n = HW                        # single full-extent block (always legal)
    else:
        tile_n = max(128, (tile_n // 128) * 128)

    n_tiles = pl.cdiv(HW, tile_n)
    # 2-way pixel split keeps both v7x TensorCores busy at small B;
    # harmless (single extra masked step at most) elsewhere.
    n_split = 2 if n_tiles >= 2 else 1
    tiles_per_split = pl.cdiv(n_tiles, n_split)

    logits_3d = predict.reshape(B, C, HW)                  # free reshape
    labels_3d = labels.reshape(B, 1, HW).astype(
        jnp.int8 if cls_num <= 127 else jnp.int32)         # 1 B/pixel of HBM

    def in_map(s, b, t):
        g = s * tiles_per_split + t
        if n_split * tiles_per_split > n_tiles:            # static (ragged split)
            g = jnp.minimum(g, n_tiles - 1)                # clamp; kernel mask zeroes it
        return (b, 0, g)

    kernel = functools.partial(
        _wce_kernel, w0=float(pix_weights[0]), w1=float(pix_weights[1]),
        hw=HW, tile_n=tile_n)

    out = pl.pallas_call(
        kernel,
        out_shape=jax.ShapeDtypeStruct((n_split, B, 2, tile_n), jnp.float32),
        grid_spec=pltpu.PrefetchScalarGridSpec(
            num_scalar_prefetch=0,
            grid=(n_split, B, tiles_per_split),
            in_specs=[
                pl.BlockSpec((pl.Squeezed(), C, tile_n), in_map),
                pl.BlockSpec((pl.Squeezed(), 1, tile_n), in_map),
            ],
            out_specs=pl.BlockSpec(
                (pl.Squeezed(), pl.Squeezed(), 2, tile_n),
                lambda s, b, t: (s, b, 0, 0)),
        ),
        compiler_params=pltpu.CompilerParams(
            dimension_semantics=("parallel", "parallel", "arbitrary"),
            vmem_limit_bytes=_VMEM_LIMIT),
    )(logits_3d, labels_3d)

    # tiny epilogue in JAX: cross-lane/split/batch reduce, then divide.
    # NOTE: if no pixel has label 0 or 1 this divides by 0 (NaN), same as
    # the PyTorch reference.
    totals = jnp.sum(out, axis=(0, 1, 3))                  # (2,)
    return totals[0] / totals[1]


def _reference(predict, labels, cls_num, pix_weights):
    """Pure-JAX mirror of the PyTorch forward, for a correctness check."""
    p = jax.nn.softmax(predict, axis=1)                      # [B,C,H,W]
    onehot = jax.nn.one_hot(labels, cls_num, axis=1,
                            dtype=jnp.float32)               # [B,C,H,W]
    p2 = jnp.transpose(p, (0, 2, 3, 1)).reshape(-1, cls_num)
    y2 = jnp.transpose(onehot, (0, 2, 3, 1)).reshape(-1, cls_num)
    ce = jnp.sum(-y2 * jnp.log(p2), axis=1)
    pix_w = y2[:, 0] * pix_weights[0] + y2[:, 1] * pix_weights[1]
    return jnp.sum(ce * pix_w) / jnp.sum(pix_w)


if __name__ == "__main__":
    pix_weights = [0.3, 0.7]           # only classes 0 and 1 are weighted

    key = jax.random.PRNGKey(0)
    k1, k2, k3, k4, k5, k6 = jax.random.split(key, 6)

    # Case 1: small aligned shape.
    B, C, H, W = 2, 4, 16, 16          # cls_num = 4
    predict = jax.random.normal(k1, (B, C, H, W), dtype=jnp.float32)
    labels = jax.random.randint(k2, (B, H, W), 0, C, dtype=jnp.int32)
    loss = jax.block_until_ready(weighted_ce_loss(predict, labels, C, pix_weights))
    ref = _reference(predict, labels, C, pix_weights)
    assert jnp.allclose(loss, ref, rtol=1e-5, atol=1e-5), (loss, ref)

    # Case 2: ragged pixel count handled as a single full-extent block.
    H2, W2 = 10, 13
    predict2 = jax.random.normal(k3, (B, C, H2, W2), dtype=jnp.float32)
    labels2 = jax.random.randint(k4, (B, H2, W2), 0, C, dtype=jnp.int32)
    loss2 = jax.block_until_ready(weighted_ce_loss(predict2, labels2, C, pix_weights))
    ref2 = _reference(predict2, labels2, C, pix_weights)
    assert jnp.allclose(loss2, ref2, rtol=1e-5, atol=1e-5), (loss2, ref2)

    # Case 3: force multi-tile + ragged tail + 2-way pixel split (exercises the
    # in-kernel tail mask and the clamped index_map on an odd tile count).
    B3, C3, H3, W3 = 1, 3, 12, 25      # HW = 300 -> 3 tiles of 128
    predict3 = jax.random.normal(k5, (B3, C3, H3, W3), dtype=jnp.float32)
    labels3 = jax.random.randint(k6, (B3, H3, W3), 0, C3, dtype=jnp.int32)
    loss3 = jax.block_until_ready(
        weighted_ce_loss(predict3, labels3, C3, pix_weights, tile_n=128))
    ref3 = _reference(predict3, labels3, C3, pix_weights)
    assert jnp.allclose(loss3, ref3, rtol=1e-5, atol=1e-5), (loss3, ref3)

    print("KERNEL_OK")
</pallas_src>

<mosaic_0001>
module attributes {stable_mosaic.version = 11 : i64} {
  func.func @_wce_kernel(%arg0: i32, %arg1: i32, %arg2: i32, %arg3: memref<1x4x256xf32, #tpu.memory_space<vmem>>, %arg4: memref<1x1x256xi8, #tpu.memory_space<vmem>>, %arg5: memref<1x1x2x256xf32, #tpu.memory_space<vmem>>) attributes {dimension_semantics = [#tpu.dimension_semantics<parallel>, #tpu.dimension_semantics<parallel>, #tpu.dimension_semantics<arbitrary>], iteration_bounds = array<i64: 1, 2, 1>, scalar_prefetch = 0 : i64, scratch_operands = 0 : i64, tpu.core_type = #tpu.core_type<tc>, window_params = [{transform_indices = @transform_0, window_bounds = array<i64: 1, 4, 256>}, {transform_indices = @transform_1, window_bounds = array<i64: 1, 1, 256>}, {transform_indices = @transform_2, window_bounds = array<i64: 1, 1, 2, 256>}]} {
    %c0_i32 = arith.constant 0 : i32
    %0 = arith.cmpi eq, %arg2, %c0_i32 : i32
    %1 = arith.extui %0 : i1 to i32
    %c0_i32_0 = arith.constant 0 : i32
    %2 = arith.cmpi ne, %1, %c0_i32_0 : i32
    scf.if %2 {
      %cst_24 = arith.constant 0.000000e+00 : f32
      %60 = vector.broadcast %cst_24 : f32 to vector<2x256xf32>
      %c0_25 = arith.constant 0 : index
      %c0_26 = arith.constant 0 : index
      %c0_27 = arith.constant 0 : index
      %c0_28 = arith.constant 0 : index
      %61 = vector.load %arg5[%c0_25, %c0_26, %c0_27, %c0_28] : memref<1x1x2x256xf32, #tpu.memory_space<vmem>>, vector<1x1x2x256xf32>
      %62 = vector.shape_cast %61 : vector<1x1x2x256xf32> to vector<2x256xf32>
      %63 = vector.shape_cast %60 : vector<2x256xf32> to vector<1x1x2x256xf32>
      tpu.vector_store %arg5[%c0_25, %c0_26, %c0_27, %c0_28], %63 {strides = array<i32>} : memref<1x1x2x256xf32, #tpu.memory_space<vmem>>, vector<1x1x2x256xf32>,
    } else {
    }
    %c0 = arith.constant 0 : index
    %c0_1 = arith.constant 0 : index
    %c0_2 = arith.constant 0 : index
    %3 = vector.load %arg3[%c0, %c0_1, %c0_2] : memref<1x4x256xf32, #tpu.memory_space<vmem>>, vector<1x4x256xf32>
    %4 = vector.shape_cast %3 : vector<1x4x256xf32> to vector<4x256xf32>
    %c0_3 = arith.constant 0 : index
    %c0_4 = arith.constant 0 : index
    %c0_5 = arith.constant 0 : index
    %5 = vector.load %arg4[%c0_3, %c0_4, %c0_5] : memref<1x1x256xi8, #tpu.memory_space<vmem>>, vector<1x1x256xi8>
    %6 = vector.shape_cast %5 : vector<1x1x256xi8> to vector<1x256xi8>
    %7 = arith.extsi %6 : vector<1x256xi8> to vector<1x256xi32>
    %cst = arith.constant dense<0xFF800000> : vector<256xf32>
    %8 = vector.multi_reduction <maximumf>, %4, %cst [0] : vector<4x256xf32> to vector<256xf32>
    %9 = vector.shape_cast %8 : vector<256xf32> to vector<1x256xf32>
    %10 = vector.broadcast %9 : vector<1x256xf32> to vector<4x256xf32>
    %11 = arith.subf %4, %10 : vector<4x256xf32>
    %12 = math.exp %11 : vector<4x256xf32>
    %cst_6 = arith.constant dense<0.000000e+00> : vector<256xf32>
    %13 = vector.multi_reduction <add>, %12, %cst_6 [0] : vector<4x256xf32> to vector<256xf32>
    %14 = vector.shape_cast %13 : vector<256xf32> to vector<1x256xf32>
    %15 = math.log %14 : vector<1x256xf32>
    %16 = arith.addf %9, %15 : vector<1x256xf32>
    %c0_i32_7 = arith.constant 0 : i32
    %17 = vector.broadcast %c0_i32_7 : i32 to vector<1x256xi32>
    %18 = arith.cmpi eq, %7, %17 : vector<1x256xi32>
    %19 = arith.extui %18 : vector<1x256xi1> to vector<1x256xi32>
    %20 = arith.sitofp %19 : vector<1x256xi32> to vector<1x256xf32>
    %c1_i32 = arith.constant 1 : i32
    %21 = vector.broadcast %c1_i32 : i32 to vector<1x256xi32>
    %22 = arith.cmpi eq, %7, %21 : vector<1x256xi32>
    %23 = arith.extui %22 : vector<1x256xi1> to vector<1x256xi32>
    %24 = arith.sitofp %23 : vector<1x256xi32> to vector<1x256xf32>
    %25 = vector.extract_strided_slice %4 {offsets = [0, 0], sizes = [1, 256], strides = [1, 1]} : vector<4x256xf32> to vector<1x256xf32>
    %26 = arith.subf %16, %25 : vector<1x256xf32>
    %27 = vector.extract_strided_slice %4 {offsets = [1, 0], sizes = [1, 256], strides = [1, 1]} : vector<4x256xf32> to vector<1x256xf32>
    %28 = arith.subf %16, %27 : vector<1x256xf32>
    %cst_8 = arith.constant 3.000000e-01 : f32
    %29 = vector.broadcast %cst_8 : f32 to vector<1x256xf32>
    %30 = arith.mulf %29, %20 : vector<1x256xf32>
    %31 = arith.mulf %30, %26 : vector<1x256xf32>
    %cst_9 = arith.constant 0.699999988 : f32
    %32 = vector.broadcast %cst_9 : f32 to vector<1x256xf32>
    %33 = arith.mulf %32, %24 : vector<1x256xf32>
    %34 = arith.mulf %33, %28 : vector<1x256xf32>
    %35 = arith.addf %31, %34 : vector<1x256xf32>
    %cst_10 = arith.constant 3.000000e-01 : f32
    %36 = vector.broadcast %cst_10 : f32 to vector<1x256xf32>
    %37 = arith.mulf %36, %20 : vector<1x256xf32>
    %cst_11 = arith.constant 0.699999988 : f32
    %38 = vector.broadcast %cst_11 : f32 to vector<1x256xf32>
    %39 = arith.mulf %38, %24 : vector<1x256xf32>
    %40 = arith.addf %37, %39 : vector<1x256xf32>
    %c1_i32_12 = arith.constant 1 : i32
    %41 = arith.muli %arg0, %c1_i32_12 : i32
    %42 = arith.addi %41, %arg2 : i32
    %c256_i32 = arith.constant 256 : i32
    %43 = arith.muli %42, %c256_i32 : i32
    %44 = tpu.iota {dimensions = array<i32: 1>} : vector<1x256xi32>
    %45 = vector.broadcast %43 : i32 to vector<1x256xi32>
    %46 = arith.addi %45, %44 : vector<1x256xi32>
    %c256_i32_13 = arith.constant 256 : i32
    %47 = vector.broadcast %c256_i32_13 : i32 to vector<1x256xi32>
    %48 = arith.cmpi slt, %46, %47 : vector<1x256xi32>
    %cst_14 = arith.constant 0.000000e+00 : f32
    %49 = vector.broadcast %cst_14 : f32 to vector<1x256xf32>
    %50 = arith.select %48, %35, %49 : vector<1x256xi1>, vector<1x256xf32>
    %cst_15 = arith.constant 0.000000e+00 : f32
    %51 = vector.broadcast %cst_15 : f32 to vector<1x256xf32>
    %52 = arith.select %48, %40, %51 : vector<1x256xi1>, vector<1x256xf32>
    %c0_16 = arith.constant 0 : index
    %c0_17 = arith.constant 0 : index
    %c0_18 = arith.constant 0 : index
    %c0_19 = arith.constant 0 : index
    %53 = vector.load %arg5[%c0_16, %c0_17, %c0_18, %c0_19] : memref<1x1x2x256xf32, #tpu.memory_space<vmem>>, vector<1x1x2x256xf32>
    %54 = vector.shape_cast %53 : vector<1x1x2x256xf32> to vector<2x256xf32>
    %55 = tpu.concatenate %50, %52 in 0 : vector<1x256xf32>, vector<1x256xf32> -> vector<2x256xf32>
    %56 = arith.addf %54, %55 : vector<2x256xf32>
    %c0_20 = arith.constant 0 : index
    %c0_21 = arith.constant 0 : index
    %c0_22 = arith.constant 0 : index
    %c0_23 = arith.constant 0 : index
    %57 = vector.load %arg5[%c0_20, %c0_21, %c0_22, %c0_23] : memref<1x1x2x256xf32, #tpu.memory_space<vmem>>, vector<1x1x2x256xf32>
    %58 = vector.shape_cast %57 : vector<1x1x2x256xf32> to vector<2x256xf32>
    %59 = vector.shape_cast %56 : vector<2x256xf32> to vector<1x1x2x256xf32>
    tpu.vector_store %arg5[%c0_20, %c0_21, %c0_22, %c0_23], %59 {strides = array<i32>} : memref<1x1x2x256xf32, #tpu.memory_space<vmem>>, vector<1x1x2x256xf32>,
    return
  }
  func.func @transform_0(%arg0: i32, %arg1: i32, %arg2: i32) -> (i32, i32, i32) {
    %c1_i32 = arith.constant 1 : i32
    %0 = arith.muli %arg0, %c1_i32 : i32
    %1 = arith.addi %0, %arg2 : i32
    %c0_i32 = arith.constant 0 : i32
    %c0_i32_0 = arith.constant 0 : i32
    return %arg1, %c0_i32, %1 : i32, i32, i32
  }
  func.func @transform_1(%arg0: i32, %arg1: i32, %arg2: i32) -> (i32, i32, i32) {
    %c1_i32 = arith.constant 1 : i32
    %0 = arith.muli %arg0, %c1_i32 : i32
    %1 = arith.addi %0, %arg2 : i32
    %c0_i32 = arith.constant 0 : i32
    %c0_i32_0 = arith.constant 0 : i32
    return %arg1, %c0_i32, %1 : i32, i32, i32
  }
  func.func @transform_2(%arg0: i32, %arg1: i32, %arg2: i32) -> (i32, i32, i32, i32) {
    %c0_i32 = arith.constant 0 : i32
    %c0_i32_0 = arith.constant 0 : i32
    %c0_i32_1 = arith.constant 0 : i32
    return %arg0, %arg1, %c0_i32, %c0_i32_0 : i32, i32, i32, i32
  }
}

</mosaic_0001>

<llo_original>
// kernel: tpu_custom_call.1
$region0: #{tpu_custom_call.1}
  #allocation0 [shape = 'u32[]', space=smem, size = 0x4, offset = 0x4, fixed_abs, tag = 'smem constant byte address 0x4 - core index']
  #allocation1 [shape = 'u32[144,128]{1,0:T(1,128)}', space=vmem, size = 0x12000, scoped, tag = 'internal scratch']
  %s0 = inlined_call_operand.hbm [shape: f32[2,4,256], index: 0, kind: input, shape index: {}]
  %s1 = inlined_call_operand.vmem [shape: s8[2,1,256], index: 1, kind: input, shape index: {}]
  %s2 = inlined_call_operand.hbm [shape: f32[1,2,2,256], index: 2, kind: output, shape index: {}]
  %s3 = sld [smem:[#allocation0]]
  $region49: #{tpu_custom_call.1} parent=0
    _
  %s5 = ssub.s32 1, %s3
  %s6 = scalar_select 0, %s5, %s3
  $region1: #{tpu_custom_call.1} parent=0
    #allocation2 [shape = 'u8[8192]{0}', space=vmem, size = 0x2000, scoped, tag = 'input window, operand 0']
    #allocation3 [shape = 's32[2]{0}', space=sflag, size = 0x8, scoped, tag = 'scoped memory for tpu_custom_call.1']
    #allocation4 [shape = 's32[2]{0}', space=sflag, size = 0x8, scoped, tag = 'scoped memory for tpu_custom_call.1']
    #allocation5 [shape = 'u8[4096]{0}', space=vmem, size = 0x1000, scoped, tag = 'output window, operand 0']
    %7 = vsyncpa [#allocation3], 0
    %s8 = scalar_lea.sflag [#allocation3], 1
    %9 = vsyncpa %s8, 0
    %10 = vsyncpa [#allocation4], 0
    %s11 = scalar_lea.sflag [#allocation4], 1
    %12 = vsyncpa %s11, 0
    loop: start=0, step=1, limit=4
    $region2: #{tpu_custom_call.1} parent=1 // loop_pre_header
      _
    $region3: #{tpu_custom_call.1} parent=1 // loop_header
      %s14 = sphi 0, %s18
      %p15 = scmp.ge.s32.totalorder %s14, 4
      %s21 = sphi 0, %s40
      %s22 = sphi 0, %s36
      %s23 = sphi 0, %s32
      %s24 = sphi 0, %s21
      %s25 = sphi 0, %s22
      %s26 = sphi 0, %s23
      %s27 = sphi 0, %s24
      %s28 = sphi 0, %s25
      %s29 = sphi 0, %s26
      %s47 = sphi 0, %s49
      %s50 = sphi 0, %s47
      %s51 = sphi 0, %s50
      %s67 = sphi 0, %s51
      %s77 = sphi 0, %s79
      %s80 = sphi 0, %s77
      %s81 = sphi 0, %s80
      %s97 = sphi 0, %s81
      %s105 = sphi 0, %s107
      %s108 = sphi 0, %s105
      %s109 = sphi 0, %s108
      %s125 = sphi 0, %s109
    $region4: #{tpu_custom_call.1} parent=1 // loop_header_branch
      %17 = sbr.rel (%p15) target = $region8
    $region5: #{tpu_custom_call.1} parent=1 // loop_body
      %s19 = ssub.s32 %s14, 1
      %s20 = ssub.s32 %s14, 2
      %s30 = sadd.s32 1, %s23
      %p31 = scmp.ge.s32.totalorder %s30, 1
      %s32 = scalar_select %p31, 0, %s30
      %s33 = sadd.s32 1, %s22
      %s34 = scalar_select %p31, %s33, %s22
      %p35 = scmp.ge.s32.totalorder %s34, 2
      %s36 = scalar_select %p35, 0, %s34
      %s37 = sadd.s32 1, %s21
      %s38 = scalar_select %p35, %s37, %s21
      %p39 = scmp.ge.s32.totalorder %s38, 1
      %s40 = scalar_select %p39, 0, %s38
      %s41 = sadd.s32 %s21, %s23
      %s42 = sadd.s32 %s40, %s32
      %s43 = ssub.s32 %s22, %s36
      %s44 = ssub.s32 %s41, %s42
      %s45 = sor.u32 %s43, %s44
      %p46 = scmp.eq.s32.totalorder %s45, 0
      %s48 = sadd.s32 %s47, 1
      %s49 = scalar_select %p46, %s47, %s48
      %p52 = pneg %p46
      %p53 = scmp.eq.s32.totalorder %s14, 1
      %p54 = por %p52, %p53
      %p55 = scmp.ne.s32.totalorder %s47, %s50
      %p56 = scmp.eq.s32.totalorder %s14, 0
      %p57 = por %p55, %p56
      %p58 = scmp.ne.s32.totalorder %s47, %s50
      %p59 = scmp.eq.s32.totalorder %s19, 1
      %p60 = por %p58, %p59
      %p61 = scmp.ne.s32.totalorder %s50, %s51
      %p62 = scmp.eq.s32.totalorder %s19, 0
      %p63 = por %p61, %p62
      %p64 = scmp.ne.s32.totalorder %s50, %s51
      %p65 = scmp.eq.s32.totalorder %s20, 1
      %p66 = por %p64, %p65
      %p68 = scmp.ne.s32.totalorder %s51, %s67
      %p69 = scmp.eq.s32.totalorder %s20, 0
      %p70 = por %p68, %p69
      %s71 = sadd.s32 %s21, %s23
      %s72 = sadd.s32 %s40, %s32
      %s73 = ssub.s32 %s22, %s36
      %s74 = ssub.s32 %s71, %s72
      %s75 = sor.u32 %s73, %s74
      %p76 = scmp.eq.s32.totalorder %s75, 0
      %s78 = sadd.s32 %s77, 1
      %s79 = scalar_select %p76, %s77, %s78
      %p82 = pneg %p76
      %p83 = scmp.eq.s32.totalorder %s14, 1
      %p84 = por %p82, %p83
      %p85 = scmp.ne.s32.totalorder %s77, %s80
      %p86 = scmp.eq.s32.totalorder %s14, 0
      %p87 = por %p85, %p86
      %p88 = scmp.ne.s32.totalorder %s77, %s80
      %p89 = scmp.eq.s32.totalorder %s19, 1
      %p90 = por %p88, %p89
      %p91 = scmp.ne.s32.totalorder %s80, %s81
      %p92 = scmp.eq.s32.totalorder %s19, 0
      %p93 = por %p91, %p92
      %p94 = scmp.ne.s32.totalorder %s80, %s81
      %p95 = scmp.eq.s32.totalorder %s20, 1
      %p96 = por %p94, %p95
      %p98 = scmp.ne.s32.totalorder %s81, %s97
      %p99 = scmp.eq.s32.totalorder %s20, 0
      %p100 = por %p98, %p99
      %s101 = ssub.s32 %s21, %s40
      %s102 = ssub.s32 %s22, %s36
      %s103 = sor.u32 %s101, %s102
      %p104 = scmp.eq.s32.totalorder %s103, 0
      %s106 = sadd.s32 %s105, 1
      %s107 = scalar_select %p104, %s105, %s106
      %p110 = pneg %p104
      %p111 = scmp.eq.s32.totalorder %s14, 1
      %p112 = por %p110, %p111
      %p113 = scmp.ne.s32.totalorder %s105, %s108
      %p114 = scmp.eq.s32.totalorder %s14, 0
      %p115 = por %p113, %p114
      %p116 = scmp.ne.s32.totalorder %s105, %s108
      %p117 = scmp.eq.s32.totalorder %s19, 1
      %p118 = por %p116, %p117
      %p119 = scmp.ne.s32.totalorder %s108, %s109
      %p120 = scmp.eq.s32.totalorder %s19, 0
      %p121 = por %p119, %p120
      %p122 = scmp.ne.s32.totalorder %s108, %s109
      %p123 = scmp.eq.s32.totalorder %s20, 1
      %p124 = por %p122, %p123
      %p126 = scmp.ne.s32.totalorder %s109, %s125
      %p127 = scmp.eq.s32.totalorder %s20, 0
      %p128 = por %p126, %p127
      %p129 = scmp.le.s32.totalorder 1, %s14
      %p130 = scmp.lt.s32.totalorder %s14, 3
      %p131 = pnand %p129, %p130
      %p132 = pneg %p131
      // Predicated region
      $region9: #{tpu_custom_call.1} parent=5 // pred_check
        _
      $region10: #{tpu_custom_call.1} parent=5 // pred_check_branch
        %134 = sbr.rel (%p131) target = $region12
      $region11: #{tpu_custom_call.1} parent=5 // pred_region
        %s135 = ssub.s32 %s14, 1
      $region12: #{tpu_custom_call.1} parent=5 // pred_fallthru
        _
      %p136 = scmp.lt.s32.totalorder %s14, 2
      // Predicated region
      $region13: #{tpu_custom_call.1} parent=5 // pred_check
        %p137 = pneg %p136
      $region14: #{tpu_custom_call.1} parent=5 // pred_check_branch
        %139 = sbr.rel (%p137) target = $region16
      $region15: #{tpu_custom_call.1} parent=5 // pred_region
        // Predicated region
        $region17: #{tpu_custom_call.1} parent=15 // pred_check
          %p140 = pneg %p57
        $region18: #{tpu_custom_call.1} parent=15 // pred_check_branch
          %142 = sbr.rel (%p140) target = $region20
        $region19: #{tpu_custom_call.1} parent=15 // pred_region
          %s143 = sand.u32 %s47, 1
          %s144 = scalar_lea.sflag [#allocation3], %s143
          %s145 = sand.u32 %s47, 1
          %s146 = smul.addr %s145, 8
          %s147 = scalar_lea.vmem [#allocation2], %s146
          %s148 = sadd.s32 %s21, %s23
          %s149 = smul.u32 2, %s148
          %s151 = ssub.s32 128, 128
          %152 = vsyncadd %s144, %s151
          %s153 = smul.addr %s22, 2
          %s154 = sadd.s32 %s149, %s153
          %s155 = smul.addr %s154, 64
          %s156 = scalar_lea.hbm %s0, %s155
          %s158 = sshll.u32 %s147, 4
          %s159 = int_to_ptr.vmem [resolvable:$true] %s158
          %161 = dma.hbm_to_vmem [thread:$0]  %s156, 128, %s159, %s144
        $region20: #{tpu_custom_call.1} parent=15 // pred_fallthru
          _
        // Predicated region
        $region21: #{tpu_custom_call.1} parent=15 // pred_check
          %p162 = pneg %p87
        $region22: #{tpu_custom_call.1} parent=15 // pred_check_branch
          %164 = sbr.rel (%p162) target = $region24
        $region23: #{tpu_custom_call.1} parent=15 // pred_region
          %s165 = sadd.s32 %s21, %s23
          %s166 = smul.u32 2, %s165
          %p167 = scmp.lt.s32.totalorder %s22, 1
          %s168 = scalar_select %p167, %s22, 1
          %p169 = scmp.lt.s32.totalorder %s166, 1
          %s170 = scalar_select %p169, %s166, 1
          %s171 = smul.addr %s168, 2
          %s172 = sadd.s32 %s170, %s171
          %s173 = scalar_lea.vmem %s1, %s172
          %s174 = sadd.s32 %s21, %s23
          %s175 = smul.u32 2, %s174
        $region24: #{tpu_custom_call.1} parent=15 // pred_fallthru
          _
      $region16: #{tpu_custom_call.1} parent=5 // pred_fallthru
        _
      %p176 = scmp.le.s32.totalorder 1, %s14
      %p177 = scmp.lt.s32.totalorder %s14, 3
      %p178 = pnand %p176, %p177
      %p179 = pneg %p178
      // Predicated region
      $region25: #{tpu_custom_call.1} parent=5 // pred_check
        _
      $region26: #{tpu_custom_call.1} parent=5 // pred_check_branch
        %181 = sbr.rel (%p178) target = $region28
      $region27: #{tpu_custom_call.1} parent=5 // pred_region
        %s182 = ssub.s32 %s14, 1
        %s183 = sand.u32 %s50, 1
        %s184 = scalar_lea.sflag [#allocation3], %s183
        %s185 = sand.u32 %s50, 1
        %s186 = smul.addr %s185, 8
        %s187 = scalar_lea.vmem [#allocation2], %s186
        // Predicated region
        $region29: #{tpu_custom_call.1} parent=27 // pred_check
          %p188 = pneg %p63
        $region30: #{tpu_custom_call.1} parent=27 // pred_check_branch
          %190 = sbr.rel (%p188) target = $region32
        $region31: #{tpu_custom_call.1} parent=27 // pred_region
          %191 = dma.done %s184, 128
        $region32: #{tpu_custom_call.1} parent=27 // pred_fallthru
          _
        %s192 = sand.u32 %s50, 1
        %s193 = scalar_lea.sflag [#allocation3], %s192
        %s194 = sand.u32 %s50, 1
        %s195 = smul.addr %s194, 8
        %s196 = scalar_lea.vmem [#allocation2], %s195
        %p197 = pneg %p63
        %p198 = pneg %p60
        %s199 = sadd.s32 %s24, %s26
        %s200 = smul.u32 2, %s199
        %p201 = scmp.lt.s32.totalorder %s25, 1
        %s202 = scalar_select %p201, %s25, 1
        %p203 = scmp.lt.s32.totalorder %s200, 1
        %s204 = scalar_select %p203, %s200, 1
        %s205 = smul.addr %s202, 2
        %s206 = sadd.s32 %s204, %s205
        %s207 = scalar_lea.vmem %s1, %s206
        %p208 = pneg %p93
        %p209 = pneg %p90
        %p210 = pneg %p121
        %p211 = pneg %p118
        %s212 = sand.u32 %s108, 1
        %s213 = scalar_lea.sflag [#allocation4], %s212
        %s214 = sand.u32 %s108, 1
        %s215 = smul.addr %s214, 4
        %s216 = scalar_lea.vmem [#allocation5], %s215
        %s217 = sadd.s32 %s24, %s26
        %s218 = smul.u32 2, %s217
        %s219 = sadd.s32 %s24, %s26
        %s220 = smul.u32 2, %s219
        %p221 = scmp.lt.s32.totalorder %s25, 1
        %s222 = scalar_select %p221, %s25, 1
        %p223 = scmp.lt.s32.totalorder %s220, 1
        %s224 = scalar_select %p223, %s220, 1
        %s225 = smul.addr %s222, 2
        %s226 = sadd.s32 %s224, %s225
        %s227 = scalar_lea.vmem %s1, %s226
        %s228 = sadd.s32 %s24, %s26
        %s229 = smul.u32 2, %s228
        %p230 = scmp.eq.s32.totalorder %s26, 0
        // Predicated region
        $region33: #{tpu_custom_call.1} parent=27 // pred_check
          %p231 = pneg %p230
        $region34: #{tpu_custom_call.1} parent=27 // pred_check_branch
          %233 = sbr.rel (%p231) target = $region36
        $region35: #{tpu_custom_call.1} parent=27 // pred_region
          %234 = vst [vmem:[%s216] sm:$0xf] 0.0
        $region36: #{tpu_custom_call.1} parent=27 // pred_fallthru
          _
        %v235 = vld [vmem:[%s187] sm:$0xff]
        %v236 = vld [vmem:[%s227] sm:$0x3]
        %v237 = vunpack.c.0.s8 %v236
        %v239 = vcombine.high %v235, %v235
        %vm241 = vcmask 1043456
        %v242 = vsel %vm241, %v235, -inf
        %v243 = vrot.slane %v242, 4
        %v244 = vmax.f32 %v242, %v243
        %v245 = vrot.slane %v244, 2
        %v246 = vmax.f32 %v244, %v245
        %v247 = vrot.slane %v246, 1
        %v248 = vmax.f32 %v246, %v247
        %v249 = vsel %vm241, %v239, -inf
        %v250 = vrot.slane %v249, 4
        %v251 = vmax.f32 %v249, %v250
        %v252 = vrot.slane %v251, 2
        %v253 = vmax.f32 %v251, %v252
        %v254 = vrot.slane %v253, 1
        %v255 = vmax.f32 %v253, %v254
        %v258 = vcombine.low %v248, %v255
        %v260 = vsub.f32 %v235, %v258
        %v261 = vmul.f32 %v260, 1.442695
        %v262 = vpow.pop %v261
        %v264 = vcombine.high %v262, %v262
        %v266 = vsel %vm241, %v262, 0.0
        %v267 = vrot.slane %v266, 4
        %v268 = vadd.f32 %v266, %v267
        %v269 = vrot.slane %v268, 2
        %v270 = vadd.f32 %v268, %v269
        %v271 = vrot.slane %v270, 1
        %v272 = vadd.f32 %v270, %v271
        %v273 = vsel %vm241, %v264, 0.0
        %v274 = vrot.slane %v273, 4
        %v275 = vadd.f32 %v273, %v274
        %v276 = vrot.slane %v275, 2
        %v277 = vadd.f32 %v275, %v276
        %v278 = vrot.slane %v277, 1
        %v279 = vadd.f32 %v277, %v278
        %v280 = vlog2.pop %v272
        %v281 = vmul.f32 %v280, 0.6931472
        %v282 = vlog2.pop %v279
        %v283 = vmul.f32 %v282, 0.6931472
        %v284 = vadd.f32 %v248, %v281
        %v285 = vadd.f32 %v255, %v283
        %vm286 = vcmp.eq.s32.totalorder %v237, 0
        %v287 = vsel %vm286, 1, 0
        %v288 = vcvt.s32.f32 %v287
        %vm289 = vcmp.eq.s32.totalorder %v237, 1
        %v290 = vsel %vm289, 1, 0
        %v291 = vcvt.s32.f32 %v290
        %v292 = vlaneseq
        %v293 = vshrl.u32 %v292, 7
        %v294 = vsub.s32 0, %v293
        %v295 = vrot.slane %v235, %v294
        %v296 = vlaneseq
        %v297 = vshrl.u32 %v296, 7
        %v298 = vsub.s32 4, %v297
        %v299 = vrot.slane %v235, %v298
        %v302 = vsub.f32 %v284, %v295
        %v303 = vsub.f32 %v285, %v299
        %v304 = vlaneseq
        %v305 = vshrl.u32 %v304, 7
        %v306 = vsub.s32 1, %v305
        %v307 = vrot.slane %v235, %v306
        %v308 = vlaneseq
        %v309 = vshrl.u32 %v308, 7
        %v310 = vsub.s32 5, %v309
        %v311 = vrot.slane %v235, %v310
        %v314 = vsub.f32 %v284, %v307
        %v315 = vsub.f32 %v285, %v311
        %v316 = vmul.f32 %v288, 0.3
        %v319 = vcombine.low %v302, %v303
        %v321 = vmul.f32 %v316, %v319
        %v322 = vmul.f32 %v291, 0.7
        %v325 = vcombine.low %v314, %v315
        %v327 = vmul.f32 %v322, %v325
        %v328 = vadd.f32 %v321, %v327
        %v329 = vadd.f32 %v316, %v322
        %s330 = sadd.s32 %s24, %s26
        %s331 = smul.u32 %s330, 256
        %v332 = vlaneseq
        %v333 = vand.u32 %v332, 127
        %v334 = vadd.s32 %v333, 128
        %v335 = vstv %s331
        %v336 = vadd.s32 %v335, %v333
        %v337 = vadd.s32 %v335, %v334
        %vm338 = vcmp.lt.s32.totalorder %v336, 256
        %vm339 = vcmp.lt.s32.totalorder %v337, 256
        %v341 = vlaneseq
        %v342 = vshrl.u32 %v341, 7
        %v343 = vsub.s32 0, %v342
        %v344 = vrot.slane %v328, %v343
        %v345 = vlaneseq
        %v346 = vshrl.u32 %v345, 7
        %v347 = vsub.s32 4, %v346
        %v348 = vrot.slane %v328, %v347
        %v351 = vsel %vm338, %v344, 0.0
        %v352 = vsel %vm339, %v348, 0.0
        %v354 = vlaneseq
        %v355 = vshrl.u32 %v354, 7
        %v356 = vsub.s32 0, %v355
        %v357 = vrot.slane %v329, %v356
        %v358 = vlaneseq
        %v359 = vshrl.u32 %v358, 7
        %v360 = vsub.s32 4, %v359
        %v361 = vrot.slane %v329, %v360
        %v364 = vsel %vm338, %v357, 0.0
        %v365 = vsel %vm339, %v361, 0.0
        %v366 = vld [vmem:[%s216] sm:$0xf]
        %v369 = vrot.slane %v364, 7
        %v370 = vrot.slane %v365, 7
        %vm373 = vcmask 1040384
        %v374 = vsel %vm373, %v351, %v369
        %v375 = vsel %vm373, %v352, %v370
        %v378 = vcombine.low %v374, %v375
        %v380 = vunpack.c.l.s4 1983009808
        %v381 = vunpack.c.0.s8 %v380
        %v382 = vlaneseq
        %v383 = vshrl.u32 %v382, 7
        %v384 = vsub.s32 %v381, %v383
        %v385 = vrot.slane %v378, %v384
        %v387 = vadd.f32 %v366, %v385
        %388 = vst [vmem:[%s216] sm:$0xf] %v387
        %s389 = sand.u32 %s108, 1
        %s390 = scalar_lea.sflag [#allocation4], %s389
        %s391 = sand.u32 %s108, 1
        %s392 = smul.addr %s391, 4
        %s393 = scalar_lea.vmem [#allocation5], %s392
        // Predicated region
        $region37: #{tpu_custom_call.1} parent=27 // pred_check
          %p394 = pneg %p118
        $region38: #{tpu_custom_call.1} parent=27 // pred_check_branch
          %396 = sbr.rel (%p394) target = $region40
        $region39: #{tpu_custom_call.1} parent=27 // pred_region
          %s398 = ssub.s32 64, 64
          %399 = vsyncadd %s390, %s398
          %s400 = smul.addr %s25, 2
          %s401 = smul.addr %s24, 4
          %s402 = sadd.s32 %s400, %s401
          %s403 = smul.addr %s402, 32
          %s404 = scalar_lea.hbm %s2, %s403
          %s406 = sshll.u32 %s393, 4
          %s407 = int_to_ptr.vmem [resolvable:$true] %s406
          %409 = dma.vmem_to_hbm [thread:$0]  %s407, 64, %s404, %s390
        $region40: #{tpu_custom_call.1} parent=27 // pred_fallthru
          _
      $region28: #{tpu_custom_call.1} parent=5 // pred_fallthru
        _
      %p410 = scmp.le.s32.totalorder 2, %s14
      // Predicated region
      $region41: #{tpu_custom_call.1} parent=5 // pred_check
        %p411 = pneg %p410
      $region42: #{tpu_custom_call.1} parent=5 // pred_check_branch
        %413 = sbr.rel (%p411) target = $region44
      $region43: #{tpu_custom_call.1} parent=5 // pred_region
        %s414 = ssub.s32 %s14, 2
        // Predicated region
        $region45: #{tpu_custom_call.1} parent=43 // pred_check
          %p415 = pneg %p124
        $region46: #{tpu_custom_call.1} parent=43 // pred_check_branch
          %417 = sbr.rel (%p415) target = $region48
        $region47: #{tpu_custom_call.1} parent=43 // pred_region
          %s418 = sand.u32 %s109, 1
          %s419 = scalar_lea.sflag [#allocation4], %s418
          %s420 = sand.u32 %s109, 1
          %s421 = smul.addr %s420, 4
          %s422 = scalar_lea.vmem [#allocation5], %s421
          %423 = dma.done %s419, 64
        $region48: #{tpu_custom_call.1} parent=43 // pred_fallthru
          _
      $region44: #{tpu_custom_call.1} parent=5 // pred_fallthru
        _
    $region6: #{tpu_custom_call.1} parent=1 // loop_footer
      %s18 = sadd.s32 1, %s14
    $region7: #{tpu_custom_call.1} parent=1 // loop_footer_branch
      %13 = sbr.rel target = $region3
    $region8: #{tpu_custom_call.1} parent=1 // loop_exit
      _
    %424 = vsyncpa [#allocation3], 1
    %s425 = scalar_lea.sflag [#allocation3], 1
    %426 = vsyncpa %s425, 1
    %427 = vsyncpa [#allocation4], 1
    %s428 = scalar_lea.sflag [#allocation4], 1
    %429 = vsyncpa %s428, 1

</llo_original>
